<compile_context>
chip_gen: v6e
topology: v6e:2x2x1
jax: 0.10.0
libtpu: 0.0.40
codegen_flags: <defaults>
</compile_context>

<pallas_src>
import functools
import numpy as np
import jax
import jax.numpy as jnp
from jax.experimental import pallas as pl
from jax.experimental.pallas import tpu as pltpu


_GP = 0.5773502691896258          # 1/sqrt(3): 2-point Gauss abscissa
_DEFAULT_DOMAIN_SIZE = 64         # FEMEngine defaults used to *build* dN kernels
_DEFAULT_DOMAIN_LENGTH = 1.0


# ---------------------------------------------------------------------------
# Faithful FEM constant construction (mirrors FEMEngine/FEM2D defaults).
# Used by the pure-JAX reference; the Pallas kernel uses the separable scalars
# below, which are algebraically identical.
# ---------------------------------------------------------------------------
def build_fem_constants(domain_size_arg,
                        default_domain_size=_DEFAULT_DOMAIN_SIZE,
                        default_domain_length=_DEFAULT_DOMAIN_LENGTH):
    gpx_1d = np.array([-_GP, _GP])
    gpw_1d = np.array([1.0, 1.0])
    ngp_1d, nbf_1d = 2, 2

    nelem = (default_domain_size - 1) // 1
    hx_build = default_domain_length / nelem
    hy_build = default_domain_length / nelem

    bf = lambda x: np.array([0.5 * (1.0 - x), 0.5 * (1.0 + x)])
    dbf = lambda x: np.array([-0.5, 0.5])

    N_gp, dN_x_gp, dN_y_gp, gpw = [], [], [], []
    for jgp in range(ngp_1d):
        for igp in range(ngp_1d):
            Nk = np.zeros((nbf_1d, nbf_1d))
            dNxk = np.zeros((nbf_1d, nbf_1d))
            dNyk = np.zeros((nbf_1d, nbf_1d))
            gpw.append(gpw_1d[igp] * gpw_1d[jgp])
            for jbf in range(nbf_1d):
                for ibf in range(nbf_1d):
                    bf_x = bf(gpx_1d[igp])[ibf]
                    bf_y = bf(gpx_1d[jgp])[jbf]
                    dbf_x = dbf(gpx_1d[igp])[ibf] * (2.0 / hx_build)
                    dbf_y = dbf(gpx_1d[jgp])[jbf] * (2.0 / hy_build)
                    Nk[jbf, ibf] = bf_x * bf_y
                    dNxk[jbf, ibf] = dbf_x * bf_y
                    dNyk[jbf, ibf] = bf_x * dbf_y
            N_gp.append(Nk)
            dN_x_gp.append(dNxk)
            dN_y_gp.append(dNyk)

    # ResidualLoss.__init__ override: hx = hy = 2 / domain_size (feeds JxW only).
    hx = 2.0 / domain_size_arg
    hy = 2.0 / domain_size_arg
    trnsfrm_jac = 0.5 * hx * (0.5 * hy)
    JxW = np.array(gpw) * trnsfrm_jac
    return N_gp, dN_x_gp, dN_y_gp, JxW


def _separable_constants(domain_size):
    """Scalar constants for the separable (sum/difference) formulation.

    Note: like the PyTorch module, the derivative scale uses the *default*
    FEMEngine hx/hy (domain_size=64), while JxW uses the runtime override
    hx = hy = 2/domain_size.  This is intentional replication.
    """
    nelem = (_DEFAULT_DOMAIN_SIZE - 1) // 1
    hx_build = _DEFAULT_DOMAIN_LENGTH / nelem
    hy_build = _DEFAULT_DOMAIN_LENGTH / nelem

    c_sx = 0.5 / hx_build            # "sum" weight for d/dx
    c_dx = 0.5 * _GP / hx_build      # "difference" weight for d/dx
    c_sy = 0.5 / hy_build
    c_dy = 0.5 * _GP / hy_build
    halfg = 0.5 * _GP

    hx = 2.0 / domain_size
    hy = 2.0 / domain_size
    jxw = 1.0 * (0.5 * hx) * (0.5 * hy)   # gpw_1d = [1,1] -> all 4 weights equal
    return dict(c_sx=c_sx, c_dx=c_dx, c_sy=c_sy, c_dy=c_dy, halfg=halfg, jxw=jxw)


# ---------------------------------------------------------------------------
# pltpu.roll convention self-check (one tiny probe kernel, cached).
# We need roll(x, shift, axis) such that result[..., i] == x[..., i+1 mod n];
# with jnp.roll semantics that is shift = n - 1.  The probe makes the kernel
# robust to the rotate-direction convention of the underlying TPU primitive.
# ---------------------------------------------------------------------------
_ROLL_NEXT_IS_SIZE_MINUS_ONE = None


def _roll_shift_for_next(size):
    global _ROLL_NEXT_IS_SIZE_MINUS_ONE
    if _ROLL_NEXT_IS_SIZE_MINUS_ONE is None:
        n = 128
        xs = np.arange(8 * n, dtype=np.float32).reshape(8, n)

        def probe(x_ref, o_ref):
            o_ref[...] = pltpu.roll(x_ref[...], n - 1, 1)

        y = np.asarray(
            pl.pallas_call(
                probe, out_shape=jax.ShapeDtypeStruct((8, n), jnp.float32)
            )(jnp.asarray(xs)))
        _ROLL_NEXT_IS_SIZE_MINUS_ONE = bool(y[0, 0] == xs[0, 1])
    return size - 1 if _ROLL_NEXT_IS_SIZE_MINUS_ONE else 1


# ---------------------------------------------------------------------------
# Pallas kernel: one (bt*Hp, Wp) batch-folded slab per field per grid step.
# ---------------------------------------------------------------------------
def _residual_kernel(s_ref, u_ref, v_ref, p_ref, r1_ref, r2_ref, div_ref, *,
                     c_sx, c_dx, c_sy, c_dy, halfg, jxw,
                     hp, h_valid, w_valid, shift_lane, shift_sub):
    nrows, wp = s_ref.shape

    # Per-element validity mask folded with the (uniform) gauss weight.
    # Invalid rows/cols (element padding and roll wrap-around) are zeroed so
    # the output scaling is a single multiply and wrapper sums stay exact.
    rowsf = jax.lax.broadcasted_iota(jnp.float32, (nrows, wp), 0)
    colsf = jax.lax.broadcasted_iota(jnp.float32, (nrows, wp), 1)
    row_in_elem = rowsf - jnp.floor(rowsf / hp) * hp   # exact for integer rows
    valid = jnp.logical_and(row_in_elem < h_valid, colsf < w_valid)
    wjxw = jnp.where(valid, jxw, 0.0)
    wjxw4 = wjxw * 4.0                                  # 4 equal gauss weights

    msk = (s_ref[...] > 0.0).astype(jnp.float32)
    u = u_ref[...] * msk
    v = v_ref[...] * msk
    p = p_ref[...] * msk

    def shifted(x):
        # x01[i,j] = x[i, j+1], x10[i,j] = x[i+1, j], x11[i,j] = x[i+1, j+1]
        # (wrap-around and cross-batch contamination land only in masked rows/cols).
        x01 = pltpu.roll(x, shift_lane, 1)
        x10 = pltpu.roll(x, shift_sub, 0)
        x11 = pltpu.roll(x01, shift_sub, 0)
        return x01, x10, x11

    def derivs(x, x01, x10, x11):
        # Separable derivative evaluation: 2 distinct values per derivative.
        dL, dLb = x01 - x, x11 - x10      # lane diffs (rows i, i+1)
        dT, dTb = x10 - x, x11 - x01      # sublane diffs (cols j, j+1)
        A = c_sx * (dL + dLb)
        Bx = c_dx * (dLb - dL)
        C = c_sy * (dT + dTb)
        Dy = c_dy * (dTb - dT)
        return (A - Bx, A + Bx), (C - Dy, C + Dy), A, C, dL, dLb

    def gauss_values(x, x01, x10, x11, dL, dLb):
        # Bilinear interpolant at the 4 gauss points, via the factorization
        # N_gp = bf_x (x) bf_y.  Returns vals[igp][jgp].
        st, sb = x + x01, x10 + x11
        top = (0.5 * st - halfg * dL, 0.5 * st + halfg * dL)    # igp = 0, 1
        bot = (0.5 * sb - halfg * dLb, 0.5 * sb + halfg * dLb)
        vals = []
        for igp in range(2):
            hS = 0.5 * (top[igp] + bot[igp])
            hD = halfg * (bot[igp] - top[igp])
            vals.append((hS - hD, hS + hD))                      # jgp = 0, 1
        return vals

    u01, u10, u11 = shifted(u)
    v01, v10, v11 = shifted(v)
    p01, p10, p11 = shifted(p)

    u_x, u_y, Au, _, u_dL, u_dLb = derivs(u, u01, u10, u11)
    v_x, v_y, _, Cv, v_dL, v_dLb = derivs(v, v01, v10, v11)
    p_x, p_y, _, _, _, _ = derivs(p, p01, p10, p11)
    u_gp = gauss_values(u, u01, u10, u11, u_dL, u_dLb)
    v_gp = gauss_values(v, v01, v10, v11, v_dL, v_dLb)

    # Residual accumulation over the 4 gauss points (peeled init, no zeros).
    r1_acc = None
    r2_acc = None
    for jgp in range(2):
        for igp in range(2):
            ug, vg = u_gp[igp][jgp], v_gp[igp][jgp]
            r1 = ug * u_x[jgp] + vg * u_y[igp] + p_x[jgp]
            r2 = ug * v_x[jgp] + vg * v_y[igp] + p_y[igp]
            r1 = r1 * r1
            r2 = r2 * r2
            r1_acc = r1 if r1_acc is None else r1_acc + r1
            r2_acc = r2 if r2_acc is None else r2_acc + r2

    r1_ref[...] = r1_acc * wjxw
    r2_ref[...] = r2_acc * wjxw
    # sum_g (u_x(jgp) + v_y(igp)) = 4 * (A_u + C_v) since weights are equal.
    div_ref[...] = (Au + Cv) * wjxw4


def _pick_block_batch(batch, hp, wp, max_bt=16, vmem_budget=16 * 1024 * 1024):
    """Largest divisor of `batch` whose per-step working set fits the budget.

    Budget accounts for 7 double-buffered input/output planes plus ~26 live
    intermediate planes (vreg spill space) per batch element.
    """
    per_elem = (2 * 7 + 26) * hp * wp * 4
    cap = int(max(1, min(max_bt, vmem_budget // per_elem)))
    best = 1
    for d in range(1, min(batch, cap) + 1):
        if batch % d == 0:
            best = d
    return best


# ---------------------------------------------------------------------------
# Wrapper: channel split, pad to (8,128)-aligned planes, fold batch into
# sublanes, pallas_call, wrapper-side reductions.
# ---------------------------------------------------------------------------
def residual_loss(dataX, dataY, domain_size):
    B, _, H, W = dataX.shape
    consts = _separable_constants(domain_size)

    # r = dataX[:, 0] is extracted but unused in the original forward.
    s = dataX[:, 1, :, :].astype(jnp.float32)
    u = dataY[:, 0, :, :].astype(jnp.float32)
    v = dataY[:, 1, :, :].astype(jnp.float32)
    p = dataY[:, 2, :, :].astype(jnp.float32)

    # Pad to (8, 128)-aligned planes: keeps rolls/stores aligned & lane-dense.
    Hp = -(-H // 8) * 8
    Wp = -(-W // 128) * 128
    if (Hp, Wp) != (H, W):
        pad_cfg = ((0, 0), (0, Hp - H), (0, Wp - W))
        s = jnp.pad(s, pad_cfg)
        u = jnp.pad(u, pad_cfg)
        v = jnp.pad(v, pad_cfg)
        p = jnp.pad(p, pad_cfg)

    bt = _pick_block_batch(B, Hp, Wp)
    nrows = bt * Hp

    # Fold batch into the sublane axis: (B, Hp, Wp) -> (B*Hp, Wp) (free reshape).
    s2 = s.reshape(B * Hp, Wp)
    u2 = u.reshape(B * Hp, Wp)
    v2 = v.reshape(B * Hp, Wp)
    p2 = p.reshape(B * Hp, Wp)

    shift_lane = _roll_shift_for_next(Wp)
    shift_sub = _roll_shift_for_next(nrows)

    kernel = functools.partial(
        _residual_kernel,
        hp=float(Hp), h_valid=float(H - 1), w_valid=float(W - 1),
        shift_lane=shift_lane, shift_sub=shift_sub,
        **consts)

    spec = pl.BlockSpec((nrows, Wp), lambda i: (i, 0))
    out_shape = tuple(jax.ShapeDtypeStruct((B * Hp, Wp), jnp.float32)
                      for _ in range(3))

    r1_2d, r2_2d, div_2d = pl.pallas_call(
        kernel,
        out_shape=out_shape,
        grid_spec=pltpu.PrefetchScalarGridSpec(
            num_scalar_prefetch=0,
            grid=(B // bt,),
            in_specs=[spec, spec, spec, spec],
            out_specs=[spec, spec, spec],
        ),
        compiler_params=pltpu.CompilerParams(
            dimension_semantics=("parallel",),
            vmem_limit_bytes=32 * 1024 * 1024),
    )(s2, u2, v2, p2)

    r1_pad = r1_2d.reshape(B, Hp, Wp)
    r2_pad = r2_2d.reshape(B, Hp, Wp)
    div_pad = div_2d.reshape(B, Hp, Wp)

    # Exact-shape element fields (padded row/col are zeroed inside the kernel).
    r1_elm = r1_pad[:, :H - 1, :W - 1]
    r2_elm = r2_pad[:, :H - 1, :W - 1]
    div_elm = div_pad[:, :H - 1, :W - 1]

    # Scalar totals in the wrapper (padded region contributes exactly zero).
    r1_total_squared = jnp.sum(r1_pad, axis=(1, 2))
    r2_total_squared = jnp.sum(r2_pad, axis=(1, 2))
    r_Total = jnp.mean((r1_total_squared + r2_total_squared) ** 2) / (domain_size ** 2)
    div_Total = jnp.sum(div_pad, axis=(1, 2))
    return r1_elm, r2_elm, div_elm, r_Total, div_Total


# ---------------------------------------------------------------------------
# Pure-JAX reference (faithful full-matrix construction) for a sanity check.
# ---------------------------------------------------------------------------
def residual_loss_ref(dataX, dataY, domain_size):
    N_gp, dN_x_gp, dN_y_gp, JxW = build_fem_constants(domain_size)
    s = dataX[:, 1]
    mask = (s > 0).astype(jnp.float32)
    u = dataY[:, 0] * mask
    v = dataY[:, 1] * mask
    p = dataY[:, 2] * mask

    def corners(x):
        return (x[:, :-1, :-1], x[:, :-1, 1:], x[:, 1:, :-1], x[:, 1:, 1:])

    def gp_eval(K, c):
        return K[0, 0] * c[0] + K[0, 1] * c[1] + K[1, 0] * c[2] + K[1, 1] * c[3]

    uc, vc, pc = corners(u), corners(v), corners(p)
    r1_elm = 0.0
    r2_elm = 0.0
    div_elm = 0.0
    for g in range(4):
        u_gp, v_gp = gp_eval(N_gp[g], uc), gp_eval(N_gp[g], vc)
        u_x, u_y = gp_eval(dN_x_gp[g], uc), gp_eval(dN_y_gp[g], uc)
        v_x, v_y = gp_eval(dN_x_gp[g], vc), gp_eval(dN_y_gp[g], vc)
        p_x, p_y = gp_eval(dN_x_gp[g], pc), gp_eval(dN_y_gp[g], pc)
        r1_elm = r1_elm + ((u_gp * u_x + v_gp * u_y + p_x) ** 2) * JxW[g]
        r2_elm = r2_elm + ((u_gp * v_x + v_gp * v_y + p_y) ** 2) * JxW[g]
        div_elm = div_elm + (u_x + v_y) * JxW[g]
    r1t = jnp.sum(r1_elm, axis=(-2, -1))
    r2t = jnp.sum(r2_elm, axis=(-2, -1))
    r_Total = jnp.mean((r1t + r2t) ** 2) / (domain_size ** 2)
    div_Total = jnp.sum(div_elm, axis=(-2, -1))
    return r1_elm, r2_elm, div_elm, r_Total, div_Total


if __name__ == "__main__":
    key = jax.random.PRNGKey(0)
    B, S = 2, 16  # batch=2, spatial=16x16; dataX has 2 channels, dataY has 3
    kx, ky = jax.random.split(key)
    dataX = jax.random.normal(kx, (B, 2, S, S), dtype=jnp.float32)
    dataY = jax.random.normal(ky, (B, 3, S, S), dtype=jnp.float32)

    outs = residual_loss(dataX, dataY, domain_size=S)
    outs = jax.block_until_ready(outs)

    refs = residual_loss_ref(dataX, dataY, S)
    for o, r in zip(outs, refs):
        np.testing.assert_allclose(np.asarray(o), np.asarray(r),
                                   rtol=2e-4, atol=1e-4)

    print("KERNEL_OK")
</pallas_src>

<mosaic_0001>
module attributes {stable_mosaic.version = 11 : i64} {
  func.func @probe(%arg0: memref<8x128xf32, #tpu.memory_space<vmem>>, %arg1: memref<8x128xf32, #tpu.memory_space<vmem>>) attributes {dimension_semantics = [], scalar_prefetch = 0 : i64, scratch_operands = 0 : i64, tpu.core_type = #tpu.core_type<tc>} {
    %c0 = arith.constant 0 : index
    %c0_0 = arith.constant 0 : index
    %0 = vector.load %arg0[%c0, %c0_0] : memref<8x128xf32, #tpu.memory_space<vmem>>, vector<8x128xf32>
    %c127_i32 = arith.constant 127 : i32
    %1 = tpu.dynamic_rotate %0 by %c127_i32 dim 1 : vector<8x128xf32>, i32 -> vector<8x128xf32>
    %c0_1 = arith.constant 0 : index
    %c0_2 = arith.constant 0 : index
    %2 = vector.load %arg1[%c0_1, %c0_2] : memref<8x128xf32, #tpu.memory_space<vmem>>, vector<8x128xf32>
    tpu.vector_store %arg1[%c0_1, %c0_2], %1 {strides = array<i32>} : memref<8x128xf32, #tpu.memory_space<vmem>>, vector<8x128xf32>,
    return
  }
}

</mosaic_0001>

<llo_original>
// kernel: tpu_custom_call.1
$region0: #{tpu_custom_call.1}
  #allocation0 [shape = 'u32[]', space=smem, size = 0x4, offset = 0x4, fixed_abs, tag = 'smem constant byte address 0x4 - core index']
  #allocation1 [shape = 'u32[144,128]{1,0:T(1,128)}', space=vmem, size = 0x12000, scoped, tag = 'internal scratch']
  %s0 = inlined_call_operand.hbm [shape: f32[8,128], index: 0, kind: input, shape index: {}]
  %s1 = inlined_call_operand.hbm [shape: f32[8,128], index: 1, kind: output, shape index: {}]
  %s2 = sld [smem:[#allocation0]]
  $region18: #{tpu_custom_call.1} parent=0
    _
  %s4 = ssub.s32 1, %s2
  %s5 = scalar_select 0, %s4, %s2
  $region1: #{tpu_custom_call.1} parent=0
    #allocation2 [shape = 'u8[4096]{0}', space=vmem, size = 0x1000, scoped, tag = 'input window, operand 0, single buffered']
    #allocation3 [shape = 's32[1]{0}', space=sflag, size = 0x4, scoped, tag = 'scoped memory for tpu_custom_call.1']
    #allocation4 [shape = 's32[1]{0}', space=sflag, size = 0x4, scoped, tag = 'scoped memory for tpu_custom_call.1']
    #allocation5 [shape = 'u8[4096]{0}', space=vmem, size = 0x1000, scoped, tag = 'output window, operand 0, single buffered']
    %6 = vsyncpa [#allocation3], 0
    %7 = vsyncpa [#allocation4], 0
    // Predicated region
    $region2: #{tpu_custom_call.1} parent=1 // pred_check
      _
    $region3: #{tpu_custom_call.1} parent=1 // pred_check_branch
      %9 = sbr.rel (0) target = $region5
    $region4: #{tpu_custom_call.1} parent=1 // pred_region
      %s11 = ssub.s32 128, 128
      %12 = vsyncadd [#allocation3], %s11
      %s14 = sshll.u32 [#allocation2], 4
      %s15 = int_to_ptr.vmem [resolvable:$true] %s14
      %17 = dma.hbm_to_vmem [thread:$0]  %s0, 128, %s15, [#allocation3]
    $region5: #{tpu_custom_call.1} parent=1 // pred_fallthru
      _
    // Predicated region
    $region6: #{tpu_custom_call.1} parent=1 // pred_check
      _
    $region7: #{tpu_custom_call.1} parent=1 // pred_check_branch
      %19 = sbr.rel (0) target = $region9
    $region8: #{tpu_custom_call.1} parent=1 // pred_region
      %20 = dma.done [#allocation3], 128
    $region9: #{tpu_custom_call.1} parent=1 // pred_fallthru
      _
    %v21 = vld [vmem:[#allocation2] sm:$0xff]
    %22 = vrot.lane.b32.xlu0 %v21, 127
    %v23 = vpop.permute.xlu0 %22
    %24 = vst [vmem:[#allocation5] sm:$0xff] %v23
    // Predicated region
    $region10: #{tpu_custom_call.1} parent=1 // pred_check
      _
    $region11: #{tpu_custom_call.1} parent=1 // pred_check_branch
      %26 = sbr.rel (0) target = $region13
    $region12: #{tpu_custom_call.1} parent=1 // pred_region
      %s28 = ssub.s32 128, 128
      %29 = vsyncadd [#allocation4], %s28
      %s31 = sshll.u32 [#allocation5], 4
      %s32 = int_to_ptr.vmem [resolvable:$true] %s31
      %34 = dma.vmem_to_hbm [thread:$0]  %s32, 128, %s1, [#allocation4]
    $region13: #{tpu_custom_call.1} parent=1 // pred_fallthru
      _
    // Predicated region
    $region14: #{tpu_custom_call.1} parent=1 // pred_check
      _
    $region15: #{tpu_custom_call.1} parent=1 // pred_check_branch
      %36 = sbr.rel (0) target = $region17
    $region16: #{tpu_custom_call.1} parent=1 // pred_region
      %37 = dma.done [#allocation4], 128
    $region17: #{tpu_custom_call.1} parent=1 // pred_fallthru
      _
    %38 = vsyncpa [#allocation3], 1
    %39 = vsyncpa [#allocation4], 1

</llo_original>
